<compile_context>
chip_gen: v6e
topology: v6e:2x2x1
jax: 0.10.0
libtpu: 0.0.40
codegen_flags: <defaults>
</compile_context>

<pallas_src>
import numpy as np
import jax
import jax.numpy as jnp
from jax.experimental import pallas as pl
from jax.experimental.pallas import tpu as pltpu

BN_EPS = 1e-5


# ----------------------------------------------------------------------------
# Glue: exact PyTorch AdaptiveAvgPool2d / bilinear-upsample (align_corners=False)
# expressed as small separable matrices (host-built, constant under jit).
# ----------------------------------------------------------------------------
def _adaptive_pool_matrix(in_size, out_size):
    P = np.zeros((out_size, in_size), np.float32)
    for i in range(out_size):
        start = (i * in_size) // out_size
        end = int(np.ceil((i + 1) * in_size / out_size))
        P[i, start:end] = 1.0 / (end - start)
    return P


def _bilinear_matrix(in_size, out_size):
    # F.upsample(mode='bilinear') == F.interpolate(..., align_corners=False)
    U = np.zeros((out_size, in_size), np.float32)
    scale = in_size / out_size
    for i in range(out_size):
        src = scale * (i + 0.5) - 0.5
        if src < 0.0:
            src = 0.0
        i0 = min(int(np.floor(src)), in_size - 1)
        i1 = min(i0 + 1, in_size - 1)
        frac = src - i0
        U[i, i0] += 1.0 - frac
        U[i, i1] += frac
    return U


# ----------------------------------------------------------------------------
# Pallas kernel: 3x3 conv (pad=1, no bias) + folded BatchNorm(eval) + ReLU.
#
#   x_ref    : (Mb, W*Cin)        bf16  Mb = images_per_block * H rows of the UNPADDED
#                                       concat tensor, flattened over (w, c)
#   w_ref    : (3, W*Cin, W*Cout) bf16  block-Toeplitz weights, one slab per kernel row
#                                       kh; width padding folded in as zero columns,
#                                       BN scale folded into the values
#   bias_ref : (1, W*Cout)        f32   folded BN bias, tiled across W
#   o_ref    : (Mb, W*Cout)       f32   lane-dense output (unmasked 128-lane stores)
# ----------------------------------------------------------------------------
def _make_bottleneck_kernel(H):
    def kernel(x_ref, w_ref, bias_ref, o_ref):
        Mb = o_ref.shape[0]
        x = x_ref[...]                                   # single aligned bf16 LHS

        # One MXU dot per kernel row kh; all three share the same aligned LHS, so no
        # sublane-offset slice of the big input tile is ever materialized.
        y_top = jnp.dot(x, w_ref[0], preferred_element_type=jnp.float32)  # -> row h+1
        y_mid = jnp.dot(x, w_ref[1], preferred_element_type=jnp.float32)  # -> row h
        y_bot = jnp.dot(x, w_ref[2], preferred_element_type=jnp.float32)  # -> row h-1

        # Re-align the kh=0 / kh=2 contributions with sublane rotations (XLU slot) and
        # zero the rows that wrapped across an image boundary == height zero-padding.
        row = jax.lax.broadcasted_iota(jnp.int32, (Mb, 1), 0)
        first_row = (row % H) == 0          # output row is the first row of its image
        last_row = (row % H) == (H - 1)     # output row is the last row of its image

        acc = y_mid
        acc = acc + jnp.where(first_row, 0.0, pltpu.roll(y_top, shift=1, axis=0))
        acc = acc + jnp.where(last_row, 0.0, pltpu.roll(y_bot, shift=Mb - 1, axis=0))

        # Folded BN bias + ReLU, lane-dense unmasked stores.
        o_ref[...] = jnp.maximum(acc + bias_ref[...], 0.0).astype(o_ref.dtype)

    return kernel


def _build_toeplitz_weights(w_hwio, bn_scale, W):
    """(3,3,Cin,Cout) HWIO weights -> (3, W*Cin, W*Cout) bf16 block-Toeplitz slabs.

    Width zero-padding (pad=1) is folded in: output column wo only picks up input
    columns wi = wo + kw - 1 that lie inside [0, W); the rest are structural zeros.
    BN(eval) scale is folded into the weight values before the bf16 cast.
    """
    KH, KW, Cin, Cout = w_hwio.shape
    w_folded = w_hwio * bn_scale.reshape(1, 1, 1, Cout)

    # P[kw, wo, wi] = 1 iff kernel tap kw of output column wo reads input column wi.
    P = np.zeros((KW, W, W), np.float32)
    for kw in range(KW):
        for wo in range(W):
            wi = wo + kw - (KW // 2)
            if 0 <= wi < W:
                P[kw, wo, wi] = 1.0

    toep = jnp.einsum("kop,hkcd->hpcod", jnp.asarray(P), w_folded)
    # (KH, wi, Cin, wo, Cout) -> (KH, W*Cin, W*Cout).  K index = wi*Cin + c matches the
    # (..., W, Cin) -> (..., W*Cin) flattening of the input; N index = wo*Cout + co
    # matches the lane-dense output layout and the tiled bias.
    return toep.reshape(KH, W * Cin, W * Cout).astype(jnp.bfloat16)


def _tensorcores_per_chip():
    try:
        kind = jax.devices()[0].device_kind.lower()
    except Exception:
        return 1
    # v7x-class chips expose 2 TensorCores per chip; v5e/v6e have 1.
    return 2 if ("v7" in kind or "7x" in kind) else 1


def _default_images_per_block(N):
    # v7x: keep >= 2 "parallel" grid steps so both TensorCores get work.
    # v5e/v6e: grid steps run serially on one TC -> merge the whole batch into one
    # MXU M (fewer grid launches, better M occupancy).
    if _tensorcores_per_chip() >= 2 and N >= 2:
        return max(1, N // 2)
    return N


def bottleneck_conv_bn_relu(x_nhwc, w_hwio, bn_scale, bn_bias, images_per_block=None):
    N, H, W, Cin = x_nhwc.shape
    Cout = w_hwio.shape[3]

    G = images_per_block if images_per_block is not None else _default_images_per_block(N)
    if N % G != 0:
        G = 1
    Mb = G * H  # matmul M rows per grid step (whole images only -> no inter-block halo)

    # No pad pass and no padded copy: a contiguous reshape + bf16 cast (fuses under jit).
    x_flat = x_nhwc.reshape(N * H, W * Cin).astype(jnp.bfloat16)
    w_toep = _build_toeplitz_weights(w_hwio, bn_scale, W)            # bf16
    bias_wide = jnp.tile(bn_bias.astype(jnp.float32), W).reshape(1, W * Cout)

    out = pl.pallas_call(
        _make_bottleneck_kernel(H),
        out_shape=jax.ShapeDtypeStruct((N * H, W * Cout), jnp.float32),
        grid_spec=pltpu.PrefetchScalarGridSpec(
            num_scalar_prefetch=0,
            grid=(N // G,),
            in_specs=[
                pl.BlockSpec((Mb, W * Cin), lambda b: (b, 0)),
                # Weight slab / bias are grid-invariant (constant index_map); Pallas
                # does not re-DMA them per step.  TODO(synk): single-buffer them
                # (pipeline_mode=pl.Buffered(1)) once the slab grows with Cin/Cout.
                pl.BlockSpec((3, W * Cin, W * Cout), lambda b: (0, 0, 0)),
                pl.BlockSpec((1, W * Cout), lambda b: (0, 0)),
            ],
            out_specs=pl.BlockSpec((Mb, W * Cout), lambda b: (b, 0)),
        ),
        compiler_params=pltpu.CompilerParams(
            dimension_semantics=("parallel",)),
    )(x_flat, w_toep, bias_wide)

    return out.reshape(N, H, W, Cout)                  # free, contiguous reshape


# ----------------------------------------------------------------------------
# Parameters (deterministic, synthetic).
# ----------------------------------------------------------------------------
def init_params(key, features=8, out_features=8, sizes=(1, 2, 3, 6)):
    n = len(sizes)
    cs = features // n
    keys = list(jax.random.split(key, 8 * n + 8))
    ki = iter(range(len(keys)))

    def fold_bn(gamma, beta, mean, var):
        scale = gamma / jnp.sqrt(var + BN_EPS)
        return scale, beta - mean * scale

    stages = []
    for _ in sizes:
        # PyTorch conv weight (cs, features, 1, 1) -> matmul weight (features, cs)
        w_oi = 0.1 * jax.random.normal(keys[next(ki)], (cs, features), jnp.float32)
        gamma = 1.0 + 0.1 * jax.random.normal(keys[next(ki)], (cs,), jnp.float32)
        beta = 0.1 * jax.random.normal(keys[next(ki)], (cs,), jnp.float32)
        mean = 0.1 * jax.random.normal(keys[next(ki)], (cs,), jnp.float32)
        var = 1.0 + 0.1 * jax.random.uniform(keys[next(ki)], (cs,), jnp.float32)
        s, b = fold_bn(gamma, beta, mean, var)
        stages.append({"w": w_oi.T, "bn_scale": s, "bn_bias": b})

    total_in = features + cs * n
    # PyTorch conv weight (O, I, 3, 3) -> HWIO for NHWC conv
    w_oihw = 0.1 * jax.random.normal(keys[next(ki)],
                                     (out_features, total_in, 3, 3), jnp.float32)
    w_hwio = jnp.transpose(w_oihw, (2, 3, 1, 0))
    gamma = 1.0 + 0.1 * jax.random.normal(keys[next(ki)], (out_features,), jnp.float32)
    beta = 0.1 * jax.random.normal(keys[next(ki)], (out_features,), jnp.float32)
    mean = 0.1 * jax.random.normal(keys[next(ki)], (out_features,), jnp.float32)
    var = 1.0 + 0.1 * jax.random.uniform(keys[next(ki)], (out_features,), jnp.float32)
    s, b = fold_bn(gamma, beta, mean, var)

    return {"sizes": tuple(sizes), "stages": stages,
            "w_bottleneck_hwio": w_hwio, "bn_scale": s, "bn_bias": b}


# ----------------------------------------------------------------------------
# Full PSPModule forward.
# ----------------------------------------------------------------------------
def psp_forward(x_nchw, params, use_pallas=True, images_per_block=None):
    x = jnp.transpose(x_nchw, (0, 2, 3, 1)).astype(jnp.float32)  # NHWC
    N, H, W, C = x.shape

    priors = []
    for s, st in zip(params["sizes"], params["stages"]):
        Ph = jnp.asarray(_adaptive_pool_matrix(H, s))
        Pw = jnp.asarray(_adaptive_pool_matrix(W, s))
        pooled = jnp.einsum("ah,bw,nhwc->nabc", Ph, Pw, x)        # AdaptiveAvgPool2d
        y = jnp.einsum("nabc,cd->nabd", pooled, st["w"])          # 1x1 conv, no bias
        y = jnp.maximum(y * st["bn_scale"] + st["bn_bias"], 0.0)  # BN(eval) + ReLU
        Uh = jnp.asarray(_bilinear_matrix(s, H))
        Uw = jnp.asarray(_bilinear_matrix(s, W))
        up = jnp.einsum("Ha,Wb,nabd->nHWd", Uh, Uw, y)            # bilinear upsample
        priors.append(up)

    cat = jnp.concatenate(priors + [x], axis=-1)                   # channel concat

    if use_pallas:
        out = bottleneck_conv_bn_relu(cat, params["w_bottleneck_hwio"],
                                      params["bn_scale"], params["bn_bias"],
                                      images_per_block=images_per_block)
    else:
        # pure-JAX f32 reference for the bottleneck conv (used only for verification)
        out = jax.lax.conv_general_dilated(
            cat, params["w_bottleneck_hwio"], window_strides=(1, 1),
            padding=((1, 1), (1, 1)),
            dimension_numbers=("NHWC", "HWIO", "NHWC"))
        out = jnp.maximum(out * params["bn_scale"] + params["bn_bias"], 0.0)

    return jnp.transpose(out, (0, 3, 1, 2))  # back to NCHW


if __name__ == "__main__":
    key = jax.random.PRNGKey(0)
    k_x, k_p = jax.random.split(key)

    features, out_features = 8, 8
    N, H, W = 2, 16, 16
    x = jax.random.normal(k_x, (N, features, H, W), jnp.float32)  # NCHW like PyTorch

    params = init_params(k_p, features=features, out_features=out_features,
                         sizes=(1, 2, 3, 6))

    # jit the whole forward so the wrapper ops (transposes, pyramid einsums, concat,
    # bf16 cast/reshape) fuse around the pallas_call instead of making separate HBM
    # round trips.  `params` is closed over -> its Python metadata stays static.
    fwd = jax.jit(lambda xx: psp_forward(xx, params, use_pallas=True))
    ref_fn = jax.jit(lambda xx: psp_forward(xx, params, use_pallas=False))

    out = jax.block_until_ready(fwd(x))
    ref = jax.block_until_ready(ref_fn(x))

    # bf16 MXU operands (f32 accumulation) vs. the pure-f32 reference -> 3e-2 tolerance.
    np.testing.assert_allclose(np.asarray(out), np.asarray(ref),
                               rtol=3e-2, atol=3e-2)
    assert out.shape == (N, out_features, H, W)

    print("KERNEL_OK")
</pallas_src>

<mosaic_0001>
module attributes {stable_mosaic.version = 11 : i64} {
  func.func @kernel(%arg0: i32, %arg1: memref<32x256xbf16, #tpu.memory_space<vmem>>, %arg2: memref<3x256x128xbf16, #tpu.memory_space<vmem>>, %arg3: memref<1x128xf32, #tpu.memory_space<vmem>>, %arg4: memref<32x128xf32, #tpu.memory_space<vmem>>) attributes {dimension_semantics = [#tpu.dimension_semantics<parallel>], iteration_bounds = array<i64: 1>, scalar_prefetch = 0 : i64, scratch_operands = 0 : i64, tpu.core_type = #tpu.core_type<tc>, window_params = [{transform_indices = @transform_0, window_bounds = array<i64: 32, 256>}, {pipeline_mode = #tpu.pipeline_mode<synchronous>, transform_indices = @transform_1, window_bounds = array<i64: 3, 256, 128>}, {pipeline_mode = #tpu.pipeline_mode<synchronous>, transform_indices = @transform_2, window_bounds = array<i64: 1, 128>}, {transform_indices = @transform_3, window_bounds = array<i64: 32, 128>}]} {
    %c0 = arith.constant 0 : index
    %c0_0 = arith.constant 0 : index
    %0 = vector.load %arg1[%c0, %c0_0] : memref<32x256xbf16, #tpu.memory_space<vmem>>, vector<32x256xbf16>
    %c0_1 = arith.constant 0 : index
    %c0_2 = arith.constant 0 : index
    %c0_3 = arith.constant 0 : index
    %1 = vector.load %arg2[%c0_1, %c0_2, %c0_3] : memref<3x256x128xbf16, #tpu.memory_space<vmem>>, vector<1x256x128xbf16>
    %2 = vector.shape_cast %1 : vector<1x256x128xbf16> to vector<256x128xbf16>
    %cst = arith.constant dense<0.000000e+00> : vector<32x128xf32>
    %3 = tpu.matmul %0, %2, %cst {dimension_numbers = #tpu.dot_dimension_numbers<[1], [0], [0], [1], [0, 0, 1, 1], [], []>} : vector<32x256xbf16>, vector<256x128xbf16>, vector<32x128xf32> -> vector<32x128xf32>
    %c1 = arith.constant 1 : index
    %c0_4 = arith.constant 0 : index
    %c0_5 = arith.constant 0 : index
    %4 = vector.load %arg2[%c1, %c0_4, %c0_5] : memref<3x256x128xbf16, #tpu.memory_space<vmem>>, vector<1x256x128xbf16>
    %5 = vector.shape_cast %4 : vector<1x256x128xbf16> to vector<256x128xbf16>
    %cst_6 = arith.constant dense<0.000000e+00> : vector<32x128xf32>
    %6 = tpu.matmul %0, %5, %cst_6 {dimension_numbers = #tpu.dot_dimension_numbers<[1], [0], [0], [1], [0, 0, 1, 1], [], []>} : vector<32x256xbf16>, vector<256x128xbf16>, vector<32x128xf32> -> vector<32x128xf32>
    %c2 = arith.constant 2 : index
    %c0_7 = arith.constant 0 : index
    %c0_8 = arith.constant 0 : index
    %7 = vector.load %arg2[%c2, %c0_7, %c0_8] : memref<3x256x128xbf16, #tpu.memory_space<vmem>>, vector<1x256x128xbf16>
    %8 = vector.shape_cast %7 : vector<1x256x128xbf16> to vector<256x128xbf16>
    %cst_9 = arith.constant dense<0.000000e+00> : vector<32x128xf32>
    %9 = tpu.matmul %0, %8, %cst_9 {dimension_numbers = #tpu.dot_dimension_numbers<[1], [0], [0], [1], [0, 0, 1, 1], [], []>} : vector<32x256xbf16>, vector<256x128xbf16>, vector<32x128xf32> -> vector<32x128xf32>
    %10 = tpu.iota {dimensions = array<i32: 0>} : vector<32x1xi32>
    %c16_i32 = arith.constant 16 : i32
    %c0_i32 = arith.constant 0 : i32
    %11 = arith.cmpi eq, %c16_i32, %c0_i32 : i32
    %c1_i32 = arith.constant 1 : i32
    %12 = arith.select %11, %c1_i32, %c16_i32 : i32
    %13 = vector.broadcast %12 : i32 to vector<32x1xi32>
    %14 = arith.remsi %10, %13 : vector<32x1xi32>
    %c0_i32_10 = arith.constant 0 : i32
    %15 = vector.broadcast %c0_i32_10 : i32 to vector<32x1xi32>
    %16 = arith.cmpi ne, %14, %15 : vector<32x1xi32>
    %c0_i32_11 = arith.constant 0 : i32
    %17 = vector.broadcast %c0_i32_11 : i32 to vector<32x1xi32>
    %18 = arith.cmpi slt, %14, %17 : vector<32x1xi32>
    %c0_i32_12 = arith.constant 0 : i32
    %19 = arith.cmpi slt, %12, %c0_i32_12 : i32
    %20 = vector.broadcast %19 : i1 to vector<32x1xi1>
    %21 = vector.broadcast %20 : vector<32x1xi1> to vector<32x1xi1>
    %22 = arith.xori %18, %21 : vector<32x1xi1>
    %23 = arith.andi %22, %16 : vector<32x1xi1>
    %24 = vector.broadcast %12 : i32 to vector<32x1xi32>
    %25 = arith.addi %14, %24 : vector<32x1xi32>
    %26 = arith.select %23, %25, %14 : vector<32x1xi1>, vector<32x1xi32>
    %c0_i32_13 = arith.constant 0 : i32
    %27 = vector.broadcast %c0_i32_13 : i32 to vector<32x1xi32>
    %28 = arith.cmpi eq, %26, %27 : vector<32x1xi32>
    %c16_i32_14 = arith.constant 16 : i32
    %c0_i32_15 = arith.constant 0 : i32
    %29 = arith.cmpi eq, %c16_i32_14, %c0_i32_15 : i32
    %c1_i32_16 = arith.constant 1 : i32
    %30 = arith.select %29, %c1_i32_16, %c16_i32_14 : i32
    %31 = vector.broadcast %30 : i32 to vector<32x1xi32>
    %32 = arith.remsi %10, %31 : vector<32x1xi32>
    %c0_i32_17 = arith.constant 0 : i32
    %33 = vector.broadcast %c0_i32_17 : i32 to vector<32x1xi32>
    %34 = arith.cmpi ne, %32, %33 : vector<32x1xi32>
    %c0_i32_18 = arith.constant 0 : i32
    %35 = vector.broadcast %c0_i32_18 : i32 to vector<32x1xi32>
    %36 = arith.cmpi slt, %32, %35 : vector<32x1xi32>
    %c0_i32_19 = arith.constant 0 : i32
    %37 = arith.cmpi slt, %30, %c0_i32_19 : i32
    %38 = vector.broadcast %37 : i1 to vector<32x1xi1>
    %39 = vector.broadcast %38 : vector<32x1xi1> to vector<32x1xi1>
    %40 = arith.xori %36, %39 : vector<32x1xi1>
    %41 = arith.andi %40, %34 : vector<32x1xi1>
    %42 = vector.broadcast %30 : i32 to vector<32x1xi32>
    %43 = arith.addi %32, %42 : vector<32x1xi32>
    %44 = arith.select %41, %43, %32 : vector<32x1xi1>, vector<32x1xi32>
    %c15_i32 = arith.constant 15 : i32
    %45 = vector.broadcast %c15_i32 : i32 to vector<32x1xi32>
    %46 = arith.cmpi eq, %44, %45 : vector<32x1xi32>
    %c1_i32_20 = arith.constant 1 : i32
    %47 = tpu.dynamic_rotate %3 by %c1_i32_20 dim 0 : vector<32x128xf32>, i32 -> vector<32x128xf32>
    %cst_21 = arith.constant 0.000000e+00 : f32
    %48 = vector.shape_cast %28 : vector<32x1xi1> to vector<32x1xi1>
    %49 = vector.broadcast %48 : vector<32x1xi1> to vector<32x128xi1>
    %50 = vector.broadcast %cst_21 : f32 to vector<32x128xf32>
    %51 = arith.select %49, %50, %47 : vector<32x128xi1>, vector<32x128xf32>
    %52 = arith.addf %6, %51 : vector<32x128xf32>
    %c31_i32 = arith.constant 31 : i32
    %53 = tpu.dynamic_rotate %9 by %c31_i32 dim 0 : vector<32x128xf32>, i32 -> vector<32x128xf32>
    %cst_22 = arith.constant 0.000000e+00 : f32
    %54 = vector.shape_cast %46 : vector<32x1xi1> to vector<32x1xi1>
    %55 = vector.broadcast %54 : vector<32x1xi1> to vector<32x128xi1>
    %56 = vector.broadcast %cst_22 : f32 to vector<32x128xf32>
    %57 = arith.select %55, %56, %53 : vector<32x128xi1>, vector<32x128xf32>
    %58 = arith.addf %52, %57 : vector<32x128xf32>
    %c0_23 = arith.constant 0 : index
    %c0_24 = arith.constant 0 : index
    %59 = vector.load %arg3[%c0_23, %c0_24] : memref<1x128xf32, #tpu.memory_space<vmem>>, vector<1x128xf32>
    %60 = vector.broadcast %59 : vector<1x128xf32> to vector<32x128xf32>
    %61 = arith.addf %58, %60 : vector<32x128xf32>
    %cst_25 = arith.constant 0.000000e+00 : f32
    %62 = vector.broadcast %cst_25 : f32 to vector<32x128xf32>
    %63 = arith.maximumf %61, %62 : vector<32x128xf32>
    %c0_26 = arith.constant 0 : index
    %c0_27 = arith.constant 0 : index
    %64 = vector.load %arg4[%c0_26, %c0_27] : memref<32x128xf32, #tpu.memory_space<vmem>>, vector<32x128xf32>
    tpu.vector_store %arg4[%c0_26, %c0_27], %63 {strides = array<i32>} : memref<32x128xf32, #tpu.memory_space<vmem>>, vector<32x128xf32>,
    return
  }
  func.func @transform_0(%arg0: i32) -> (i32, i32) {
    %c0_i32 = arith.constant 0 : i32
    %c0_i32_0 = arith.constant 0 : i32
    return %arg0, %c0_i32 : i32, i32
  }
  func.func @transform_1(%arg0: i32) -> (i32, i32, i32) {
    %c0_i32 = arith.constant 0 : i32
    %c0_i32_0 = arith.constant 0 : i32
    %c0_i32_1 = arith.constant 0 : i32
    %c0_i32_2 = arith.constant 0 : i32
    return %c0_i32, %c0_i32_0, %c0_i32_1 : i32, i32, i32
  }
  func.func @transform_2(%arg0: i32) -> (i32, i32) {
    %c0_i32 = arith.constant 0 : i32
    %c0_i32_0 = arith.constant 0 : i32
    %c0_i32_1 = arith.constant 0 : i32
    return %c0_i32, %c0_i32_0 : i32, i32
  }
  func.func @transform_3(%arg0: i32) -> (i32, i32) {
    %c0_i32 = arith.constant 0 : i32
    %c0_i32_0 = arith.constant 0 : i32
    return %arg0, %c0_i32 : i32, i32
  }
}

</mosaic_0001>

<llo_original>
// kernel: tile.6
$region0: #{tile.6}
  #allocation0 [shape = 's32[1]{0}', space=sflag, size = 0x4, scoped, tag = 'scoped memory for tile.6']
  %s0 = inlined_call_operand.vmem [shape: f32[8], index: 0, kind: input, shape index: {}]
  %s1 = inlined_call_operand.vmem [shape: f32[16,8], index: 1, kind: output, shape index: {}]
  // Predicated region
  $region2: #{tile.6} parent=0 // pred_check
    _
  $region3: #{tile.6} parent=0 // pred_check_branch
    %3 = sbr.rel (0) target = $region5
  $region4: #{tile.6} parent=0 // pred_region
    _
  $region5: #{tile.6} parent=0 // pred_fallthru
    _
  %v4 = vld [vmem:[%s0] ss:$0 sm:$0xff]
  %5 = vst [vmem:[%s1] sm:$0xff] %v4
  %s6 = scalar_lea.vmem %s1, 8
  %7 = vst [vmem:[%s6] sm:$0xff] %v4

// kernel: tile.7
$region0: #{tile.7}
  %s0 = inlined_call_operand.vmem [shape: f32[16,8], index: 0, kind: input, shape index: {}]
  %s1 = inlined_call_operand.vmem [shape: f32[1,128], index: 1, kind: output, shape index: {}]
  $region1: #{tile.7} parent=0
    #allocation0 [shape = 'u8[4096]{0}', space=vmem, size = 0x1000, scoped, tag = 'scoped mem for output reshape']
    %v2 = vld [vmem:[%s0] sm:$0x1]
    %vm3 = vcmask 64512
    %4 = vst.msk [vmem:[#allocation0] sm:$0x1] %vm3, %v2
    %s5 = scalar_lea.vmem %s0, 15
    %v6 = vld [vmem:[%s5] sm:$0x1]
    %7 = vrot.lane.b32.xlu0 %v6, 120
    %v8 = vpop.permute.xlu0 %7
    %vm9 = vcmask 1048512
    %10 = vst.msk [vmem:[#allocation0] sm:$0x1] %vm9, %v8
    %s11 = scalar_lea.vmem %s0, 14
    %v12 = vld [vmem:[%s11] sm:$0x1]
    %13 = vrot.lane.b32.xlu0 %v12, 112
    %v14 = vpop.permute.xlu0 %13
    %vm15 = vcmask 982912
    %16 = vst.msk [vmem:[#allocation0] sm:$0x1] %vm15, %v14
    %s17 = scalar_lea.vmem %s0, 13
    %v18 = vld [vmem:[%s17] sm:$0x1]
    %19 = vrot.lane.b32.xlu0 %v18, 104
    %v20 = vpop.permute.xlu0 %19
    %vm21 = vcmask 917312
    %22 = vst.msk [vmem:[#allocation0] sm:$0x1] %vm21, %v20
    %s23 = scalar_lea.vmem %s0, 12
    %v24 = vld [vmem:[%s23] sm:$0x1]
    %25 = vrot.lane.b32.xlu0 %v24, 96
    %v26 = vpop.permute.xlu0 %25
    %vm27 = vcmask 851712
    %28 = vst.msk [vmem:[#allocation0] sm:$0x1] %vm27, %v26
    %s29 = scalar_lea.vmem %s0, 11
    %v30 = vld [vmem:[%s29] sm:$0x1]
    %31 = vrot.lane.b32.xlu0 %v30, 88
    %v32 = vpop.permute.xlu0 %31
    %vm33 = vcmask 786112
    %34 = vst.msk [vmem:[#allocation0] sm:$0x1] %vm33, %v32
    %s35 = scalar_lea.vmem %s0, 10
    %v36 = vld [vmem:[%s35] sm:$0x1]
    %37 = vrot.lane.b32.xlu0 %v36, 80
    %v38 = vpop.permute.xlu0 %37
    %vm39 = vcmask 720512
    %40 = vst.msk [vmem:[#allocation0] sm:$0x1] %vm39, %v38
    %s41 = scalar_lea.vmem %s0, 9
    %v42 = vld [vmem:[%s41] sm:$0x1]
    %43 = vrot.lane.b32.xlu0 %v42, 72
    %v44 = vpop.permute.xlu0 %43
    %vm45 = vcmask 654912
    %46 = vst.msk [vmem:[#allocation0] sm:$0x1] %vm45, %v44
    %s47 = scalar_lea.vmem %s0, 8
    %v48 = vld [vmem:[%s47] sm:$0x1]
    %49 = vrot.lane.b32.xlu0 %v48, 64
    %v50 = vpop.permute.xlu0 %49
    %vm51 = vcmask 589312
    %52 = vst.msk [vmem:[#allocation0] sm:$0x1] %vm51, %v50
    %s53 = scalar_lea.vmem %s0, 7
    %v54 = vld [vmem:[%s53] sm:$0x1]
    %55 = vrot.lane.b32.xlu0 %v54, 56
    %v56 = vpop.permute.xlu0 %55
    %vm57 = vcmask 523712
    %58 = vst.msk [vmem:[#allocation0] sm:$0x1] %vm57, %v56
    %s59 = scalar_lea.vmem %s0, 6
    %v60 = vld [vmem:[%s59] sm:$0x1]
    %61 = vrot.lane.b32.xlu0 %v60, 48
    %v62 = vpop.permute.xlu0 %61
    %vm63 = vcmask 458112
    %64 = vst.msk [vmem:[#allocation0] sm:$0x1] %vm63, %v62
    %s65 = scalar_lea.vmem %s0, 5
    %v66 = vld [vmem:[%s65] sm:$0x1]
    %67 = vrot.lane.b32.xlu0 %v66, 40
    %v68 = vpop.permute.xlu0 %67
    %vm69 = vcmask 392512
    %70 = vst.msk [vmem:[#allocation0] sm:$0x1] %vm69, %v68
    %s71 = scalar_lea.vmem %s0, 4
    %v72 = vld [vmem:[%s71] sm:$0x1]
    %73 = vrot.lane.b32.xlu0 %v72, 32
    %v74 = vpop.permute.xlu0 %73
    %vm75 = vcmask 326912
    %76 = vst.msk [vmem:[#allocation0] sm:$0x1] %vm75, %v74
    %s77 = scalar_lea.vmem %s0, 3
    %v78 = vld [vmem:[%s77] sm:$0x1]
    %79 = vrot.lane.b32.xlu0 %v78, 24
    %v80 = vpop.permute.xlu0 %79
    %vm81 = vcmask 261312
    %82 = vst.msk [vmem:[#allocation0] sm:$0x1] %vm81, %v80
    %s83 = scalar_lea.vmem %s0, 2
    %v84 = vld [vmem:[%s83] sm:$0x1]
    %85 = vrot.lane.b32.xlu0 %v84, 16
    %v86 = vpop.permute.xlu0 %85
    %vm87 = vcmask 195712
    %88 = vst.msk [vmem:[#allocation0] sm:$0x1] %vm87, %v86
    %s89 = scalar_lea.vmem %s0, 1
    %v90 = vld [vmem:[%s89] sm:$0x1]
    %91 = vrot.lane.b32.xlu0 %v90, 8
    %v92 = vpop.permute.xlu0 %91
    %vm93 = vcmask 130112
    %94 = vst.msk [vmem:[#allocation0] sm:$0x1] %vm93, %v92
    %s96 = sshll.u32 1, 1
    %s97 = ssub.s32 %s96, 1
    %v99 = vld [vmem:[#allocation0] sm:%s97]
    %s100 = sshll.u32 1, 1
    %s101 = ssub.s32 %s100, 1
    %102 = vst [vmem:[%s1] sm:%s101] %v99

// kernel: _lambda_.1
$region0: #{_lambda_.1}
  #allocation0 [shape = 'u32[]', space=smem, size = 0x4, offset = 0x4, fixed_abs, tag = 'smem constant byte address 0x4 - core index']
  #allocation1 [shape = 'u32[144,128]{1,0:T(1,128)}', space=vmem, size = 0x12000, scoped, tag = 'internal scratch']
  %s0 = inlined_call_operand.vmem [shape: bf16[32,256], index: 0, kind: input, shape index: {}]
  %s1 = inlined_call_operand.vmem [shape: bf16[3,256,128], index: 1, kind: input, shape index: {}]
  %s2 = inlined_call_operand.vmem [shape: f32[1,128], index: 2, kind: input, shape index: {}]
  %s3 = inlined_call_operand.vmem [shape: f32[32,128], index: 3, kind: output, shape index: {}]
  %s4 = sld [smem:[#allocation0]]
  $region22: #{_lambda_.1} parent=0
    _
  %s6 = ssub.s32 1, %s4
  %s7 = scalar_select 0, %s6, %s4
  // Predicated region
  $region2: #{_lambda_.1} parent=0 // pred_check
    _
  $region3: #{_lambda_.1} parent=0 // pred_check_branch
    %9 = sbr.rel (0) target = $region5
  $region4: #{_lambda_.1} parent=0 // pred_region
    _
  $region5: #{_lambda_.1} parent=0 // pred_fallthru
    _
  // Predicated region
  $region6: #{_lambda_.1} parent=0 // pred_check
    _
  $region7: #{_lambda_.1} parent=0 // pred_check_branch
    %11 = sbr.rel (0) target = $region9
  $region8: #{_lambda_.1} parent=0 // pred_region
    _
  $region9: #{_lambda_.1} parent=0 // pred_fallthru
    _
  // Predicated region
  $region10: #{_lambda_.1} parent=0 // pred_check
    _
  $region11: #{_lambda_.1} parent=0 // pred_check_branch
    %13 = sbr.rel (0) target = $region13
  $region12: #{_lambda_.1} parent=0 // pred_region
    _
  $region13: #{_lambda_.1} parent=0 // pred_fallthru
    _
  %v15 = vld [vmem:[%s0] sm:$0xff]
  %v16 = vld [vmem:[%s0 + $0x8] sm:$0xff]
  %v17 = vld [vmem:[%s0 + $0x10] sm:$0xff]
  %v18 = vld [vmem:[%s0 + $0x18] sm:$0xff]
  %v19 = vld [vmem:[%s1] sm:$0xf]
  %v20 = vld [vmem:[%s1 + $0x4] sm:$0xf]
  %v21 = vld [vmem:[%s1 + $0x8] sm:$0xf]
  %v22 = vld [vmem:[%s1 + $0xc] sm:$0xf]
  %v23 = vld [vmem:[%s1 + $0x10] sm:$0xf]
  %v24 = vld [vmem:[%s1 + $0x14] sm:$0xf]
  %v25 = vld [vmem:[%s1 + $0x18] sm:$0xf]
  %v26 = vld [vmem:[%s1 + $0x1c] sm:$0xf]
  %v27 = vld [vmem:[%s1 + $0x20] sm:$0xf]
  %v28 = vld [vmem:[%s1 + $0x24] sm:$0xf]
  %v29 = vld [vmem:[%s1 + $0x28] sm:$0xf]
  %v30 = vld [vmem:[%s1 + $0x2c] sm:$0xf]
  %v31 = vld [vmem:[%s1 + $0x30] sm:$0xf]
  %v32 = vld [vmem:[%s1 + $0x34] sm:$0xf]
  %v33 = vld [vmem:[%s1 + $0x38] sm:$0xf]
  %v34 = vld [vmem:[%s1 + $0x3c] sm:$0xf]
  %v35 = vld [vmem:[%s1 + $0x40] sm:$0xf]
  %v36 = vld [vmem:[%s1 + $0x44] sm:$0xf]
  %v37 = vld [vmem:[%s1 + $0x48] sm:$0xf]
  %v38 = vld [vmem:[%s1 + $0x4c] sm:$0xf]
  %v39 = vld [vmem:[%s1 + $0x50] sm:$0xf]
  %v40 = vld [vmem:[%s1 + $0x54] sm:$0xf]
  %v41 = vld [vmem:[%s1 + $0x58] sm:$0xf]
  %v42 = vld [vmem:[%s1 + $0x5c] sm:$0xf]
  %v43 = vld [vmem:[%s1 + $0x60] sm:$0xf]
  %v44 = vld [vmem:[%s1 + $0x64] sm:$0xf]
  %v45 = vld [vmem:[%s1 + $0x68] sm:$0xf]
  %v46 = vld [vmem:[%s1 + $0x6c] sm:$0xf]
  %v47 = vld [vmem:[%s1 + $0x70] sm:$0xf]
  %v48 = vld [vmem:[%s1 + $0x74] sm:$0xf]
  %v49 = vld [vmem:[%s1 + $0x78] sm:$0xf]
  %v50 = vld [vmem:[%s1 + $0x7c] sm:$0xf]
  %v55 = vunpack.c.l.b16 %v15
  %v56 = vunpack.c.h.b16 %v15
  %v57 = vunpack.c.l.b16 %v16
  %v58 = vunpack.c.h.b16 %v16
  %v59 = vunpack.c.l.b16 %v17
  %v60 = vunpack.c.h.b16 %v17
  %v61 = vunpack.c.l.b16 %v18
  %v62 = vunpack.c.h.b16 %v18
  %v63 = vpack.c.b16 %v57, %v55
  %v64 = vpack.c.b16 %v58, %v56
  %v65 = vpack.c.b16 %v61, %v59
  %v66 = vpack.c.b16 %v62, %v60
  %v103 = vunpack.c.l.b16 %v19
  %v104 = vunpack.c.l.b16 %v20
  %v105 = vunpack.c.l.b16 %v21
  %v106 = vunpack.c.l.b16 %v22
  %v107 = vunpack.c.l.b16 %v23
  %v108 = vunpack.c.l.b16 %v24
  %v109 = vunpack.c.l.b16 %v25
  %v110 = vunpack.c.l.b16 %v26
  %v111 = vunpack.c.l.b16 %v27
  %v112 = vunpack.c.l.b16 %v28
  %v113 = vunpack.c.l.b16 %v29
  %v114 = vunpack.c.l.b16 %v30
  %v115 = vunpack.c.l.b16 %v31
  %v116 = vunpack.c.l.b16 %v32
  %v117 = vunpack.c.l.b16 %v33
  %v118 = vunpack.c.l.b16 %v34
  %v119 = vunpack.c.l.b16 %v35
  %v120 = vunpack.c.l.b16 %v36
  %v121 = vunpack.c.l.b16 %v37
  %v122 = vunpack.c.l.b16 %v38
  %v123 = vunpack.c.l.b16 %v39
  %v124 = vunpack.c.l.b16 %v40
  %v125 = vunpack.c.l.b16 %v41
  %v126 = vunpack.c.l.b16 %v42
  %v127 = vunpack.c.l.b16 %v43
  %v128 = vunpack.c.l.b16 %v44
  %v129 = vunpack.c.l.b16 %v45
  %v130 = vunpack.c.l.b16 %v46
  %v131 = vunpack.c.l.b16 %v47
  %v132 = vunpack.c.l.b16 %v48
  %v133 = vunpack.c.l.b16 %v49
  %v134 = vunpack.c.l.b16 %v50
  %v135 = vpack.c.b16 %v104, %v103
  %v136 = vpack.c.b16 %v106, %v105
  %v137 = vpack.c.b16 %v108, %v107
  %v138 = vpack.c.b16 %v110, %v109
  %v139 = vpack.c.b16 %v112, %v111
  %v140 = vpack.c.b16 %v114, %v113
  %v141 = vpack.c.b16 %v116, %v115
  %v142 = vpack.c.b16 %v118, %v117
  %v143 = vpack.c.b16 %v120, %v119
  %v144 = vpack.c.b16 %v122, %v121
  %v145 = vpack.c.b16 %v124, %v123
  %v146 = vpack.c.b16 %v126, %v125
  %v147 = vpack.c.b16 %v128, %v127
  %v148 = vpack.c.b16 %v130, %v129
  %v149 = vpack.c.b16 %v132, %v131
  %v150 = vpack.c.b16 %v134, %v133
  %167 = vmatprep.subr.bf16.mxu0 0
  %168 = vmatpush1.bf16.msra.mxu0 %v142
  %169 = vmatprep.subr.bf16.mxu0 0
  %170 = vmatpush1.bf16.msra.mxu0 %v141
  %171 = vmatprep.subr.bf16.mxu0 0
  %172 = vmatpush1.bf16.msra.mxu0 %v140
  %173 = vmatprep.subr.bf16.mxu0 0
  %174 = vmatpush1.bf16.msra.mxu0 %v139
  %175 = vmatprep.subr.bf16.mxu0 0
  %176 = vmatpush1.bf16.msra.mxu0 %v138
  %177 = vmatprep.subr.bf16.mxu0 0
  %178 = vmatpush1.bf16.msra.mxu0 %v137
  %179 = vmatprep.subr.bf16.mxu0 0
  %180 = vmatpush1.bf16.msra.mxu0 %v136
  %181 = vmatprep.subr.bf16.mxu0 0
  %182 = vmatpush1.bf16.msra.mxu0 %v135
  %183 = vmatprep.subr.bf16.mxu0 0
  %184 = vmatpush2.bf16.msra.mxu0 %v150
  %185 = vmatprep.subr.bf16.mxu0 0
  %186 = vmatpush2.bf16.msra.mxu0 %v149
  %187 = vmatprep.subr.bf16.mxu0 0
  %188 = vmatpush2.bf16.msra.mxu0 %v148
  %189 = vmatprep.subr.bf16.mxu0 0
  %190 = vmatpush2.bf16.msra.mxu0 %v147
  %191 = vmatprep.subr.bf16.mxu0 0
  %192 = vmatpush2.bf16.msra.mxu0 %v146
  %193 = vmatprep.subr.bf16.mxu0 0
  %194 = vmatpush2.bf16.msra.mxu0 %v145
  %195 = vmatprep.subr.bf16.mxu0 0
  %196 = vmatpush2.bf16.msra.mxu0 %v144
  %197 = vmatprep.subr.bf16.mxu0 0
  %198 = vmatpush2.bf16.msra.mxu0 %v143
  %199 = vmatprep.mubr.bf16.mxu0 %v64
  %200 = vmatmul.mubr.bf16.gmra.mxu0 %v63
  %v201 = vpop.f32.mrf.mxu0
  %v202 = vadd.f32 0.0, %v201
  %v203 = vpop.f32.mrf.mxu0
  %v204 = vpop.f32.mrf.mxu0
  %v205 = vadd.f32 0.0, %v204
  %v206 = vpop.f32.mrf.mxu0
  %207 = vmatprep.mubr.bf16.mxu0 %v66
  %208 = vmatmul.mubr.bf16.gmra.mxu0 %v65
  %v209 = vpop.f32.mrf.mxu0
  %v210 = vadd.f32 0.0, %v209
  %v211 = vpop.f32.mrf.mxu0
  %v212 = vpop.f32.mrf.mxu0
  %v213 = vadd.f32 0.0, %v212
  %v214 = vpop.f32.mrf.mxu0
  %215 = vdwg.mxu0
  %s216 = scalar_lea.vmem %s1, 128
  %v217 = vld [vmem:[%s216] sm:$0xf]
  %v218 = vld [vmem:[%s216 + $0x4] sm:$0xf]
  %v219 = vld [vmem:[%s216 + $0x8] sm:$0xf]
  %v220 = vld [vmem:[%s216 + $0xc] sm:$0xf]
  %v221 = vld [vmem:[%s216 + $0x10] sm:$0xf]
  %v222 = vld [vmem:[%s216 + $0x14] sm:$0xf]
  %v223 = vld [vmem:[%s216 + $0x18] sm:$0xf]
  %v224 = vld [vmem:[%s216 + $0x1c] sm:$0xf]
  %v225 = vld [vmem:[%s216 + $0x20] sm:$0xf]
  %v226 = vld [vmem:[%s216 + $0x24] sm:$0xf]
  %v227 = vld [vmem:[%s216 + $0x28] sm:$0xf]
  %v228 = vld [vmem:[%s216 + $0x2c] sm:$0xf]
  %v229 = vld [vmem:[%s216 + $0x30] sm:$0xf]
  %v230 = vld [vmem:[%s216 + $0x34] sm:$0xf]
  %v231 = vld [vmem:[%s216 + $0x38] sm:$0xf]
  %v232 = vld [vmem:[%s216 + $0x3c] sm:$0xf]
  %v233 = vld [vmem:[%s216 + $0x40] sm:$0xf]
  %v234 = vld [vmem:[%s216 + $0x44] sm:$0xf]
  %v235 = vld [vmem:[%s216 + $0x48] sm:$0xf]
  %v236 = vld [vmem:[%s216 + $0x4c] sm:$0xf]
  %v237 = vld [vmem:[%s216 + $0x50] sm:$0xf]
  %v238 = vld [vmem:[%s216 + $0x54] sm:$0xf]
  %v239 = vld [vmem:[%s216 + $0x58] sm:$0xf]
  %v240 = vld [vmem:[%s216 + $0x5c] sm:$0xf]
  %v241 = vld [vmem:[%s216 + $0x60] sm:$0xf]
  %v242 = vld [vmem:[%s216 + $0x64] sm:$0xf]
  %v243 = vld [vmem:[%s216 + $0x68] sm:$0xf]
  %v244 = vld [vmem:[%s216 + $0x6c] sm:$0xf]
  %v245 = vld [vmem:[%s216 + $0x70] sm:$0xf]
  %v246 = vld [vmem:[%s216 + $0x74] sm:$0xf]
  %v247 = vld [vmem:[%s216 + $0x78] sm:$0xf]
  %v248 = vld [vmem:[%s216 + $0x7c] sm:$0xf]
  %s249 = scalar_lea.vmem %s1, 256
  %v250 = vld [vmem:[%s249] sm:$0xf]
  %v251 = vld [vmem:[%s249 + $0x4] sm:$0xf]
  %v252 = vld [vmem:[%s249 + $0x8] sm:$0xf]
  %v253 = vld [vmem:[%s249 + $0xc] sm:$0xf]
  %v254 = vld [vmem:[%s249 + $0x10] sm:$0xf]
  %v255 = vld [vmem:[%s249 + $0x14] sm:$0xf]
  %v256 = vld [vmem:[%s249 + $0x18] sm:$0xf]
  %v257 = vld [vmem:[%s249 + $0x1c] sm:$0xf]
  %v258 = vld [vmem:[%s249 + $0x20] sm:$0xf]
  %v259 = vld [vmem:[%s249 + $0x24] sm:$0xf]
  %v260 = vld [vmem:[%s249 + $0x28] sm:$0xf]
  %v261 = vld [vmem:[%s249 + $0x2c] sm:$0xf]
  %v262 = vld [vmem:[%s249 + $0x30] sm:$0xf]
  %v263 = vld [vmem:[%s249 + $0x34] sm:$0xf]
  %v264 = vld [vmem:[%s249 + $0x38] sm:$0xf]
  %v265 = vld [vmem:[%s249 + $0x3c] sm:$0xf]
  %v266 = vld [vmem:[%s249 + $0x40] sm:$0xf]
  %v267 = vld [vmem:[%s249 + $0x44] sm:$0xf]
  %v268 = vld [vmem:[%s249 + $0x48] sm:$0xf]
  %v269 = vld [vmem:[%s249 + $0x4c] sm:$0xf]
  %v270 = vld [vmem:[%s249 + $0x50] sm:$0xf]
  %v271 = vld [vmem:[%s249 + $0x54] sm:$0xf]
  %v272 = vld [vmem:[%s249 + $0x58] sm:$0xf]
  %v273 = vld [vmem:[%s249 + $0x5c] sm:$0xf]
  %v274 = vld [vmem:[%s249 + $0x60] sm:$0xf]
  %v275 = vld [vmem:[%s249 + $0x64] sm:$0xf]
  %v276 = vld [vmem:[%s249 + $0x68] sm:$0xf]
  %v277 = vld [vmem:[%s249 + $0x6c] sm:$0xf]
  %v278 = vld [vmem:[%s249 + $0x70] sm:$0xf]
  %v279 = vld [vmem:[%s249 + $0x74] sm:$0xf]
  %v280 = vld [vmem:[%s249 + $0x78] sm:$0xf]
  %v281 = vld [vmem:[%s249 + $0x7c] sm:$0xf]
  %v314 = vunpack.c.l.b16 %v250
  %v315 = vunpack.c.l.b16 %v251
  %v316 = vunpack.c.l.b16 %v252
  %v317 = vunpack.c.l.b16 %v253
  %v318 = vunpack.c.l.b16 %v254
  %v319 = vunpack.c.l.b16 %v255
  %v320 = vunpack.c.l.b16 %v256
  %v321 = vunpack.c.l.b16 %v257
  %v322 = vunpack.c.l.b16 %v258
  %v323 = vunpack.c.l.b16 %v259
  %v324 = vunpack.c.l.b16 %v260
  %v325 = vunpack.c.l.b16 %v261
  %v326 = vunpack.c.l.b16 %v262
  %v327 = vunpack.c.l.b16 %v263
  %v328 = vunpack.c.l.b16 %v264
  %v329 = vunpack.c.l.b16 %v265
  %v330 = vunpack.c.l.b16 %v266
  %v331 = vunpack.c.l.b16 %v267
  %v332 = vunpack.c.l.b16 %v268
  %v333 = vunpack.c.l.b16 %v269
  %v334 = vunpack.c.l.b16 %v270
  %v335 = vunpack.c.l.b16 %v271
  %v336 = vunpack.c.l.b16 %v272
  %v337 = vunpack.c.l.b16 %v273
  %v338 = vunpack.c.l.b16 %v274
  %v339 = vunpack.c.l.b16 %v275
  %v340 = vunpack.c.l.b16 %v276
  %v341 = vunpack.c.l.b16 %v277
  %v342 = vunpack.c.l.b16 %v278
  %v343 = vunpack.c.l.b16 %v279
  %v344 = vunpack.c.l.b16 %v280
  %v345 = vunpack.c.l.b16 %v281
  %v346 = vpack.c.b16 %v315, %v314
  %v347 = vpack.c.b16 %v317, %v316
  %v348 = vpack.c.b16 %v319, %v318
  %v349 = vpack.c.b16 %v321, %v320
  %v350 = vpack.c.b16 %v323, %v322
  %v351 = vpack.c.b16 %v325, %v324
  %v352 = vpack.c.b16 %v327, %v326
  %v353 = vpack.c.b16 %v329, %v328
  %v354 = vpack.c.b16 %v331, %v330
  %v355 = vpack.c.b16 %v333, %v332
  %v356 = vpack.c.b16 %v335, %v334
  %v357 = vpack.c.b16 %v337, %v336
  %v358 = vpack.c.b16 %v339, %v338
  %v359 = vpack.c.b16 %v341, %v340
  %v360 = vpack.c.b16 %v343, %v342
  %v361 = vpack.c.b16 %v345, %v344
  %378 = vmatprep.subr.bf16.mxu0 0
  %379 = vmatpush1.bf16.msra.mxu0 %v353
  %380 = vmatprep.subr.bf16.mxu0 0
  %381 = vmatpush1.bf16.msra.mxu0 %v352
  %382 = vmatprep.subr.bf16.mxu0 0
  %383 = vmatpush1.bf16.msra.mxu0 %v351
  %384 = vmatprep.subr.bf16.mxu0 0
  %385 = vmatpush1.bf16.msra.mxu0 %v350
  %386 = vmatprep.subr.bf16.mxu0 0
  %387 = vmatpush1.bf16.msra.mxu0 %v349
  %388 = vmatprep.subr.bf16.mxu0 0
  %389 = vmatpush1.bf16.msra.mxu0 %v348
  %390 = vmatprep.subr.bf16.mxu0 0
  %391 = vmatpush1.bf16.msra.mxu0 %v347
  %392 = vmatprep.subr.bf16.mxu0 0
  %393 = vmatpush1.bf16.msra.mxu0 %v346
  %394 = vmatprep.subr.bf16.mxu0 0
  %395 = vmatpush2.bf16.msra.mxu0 %v361
  %396 = vmatprep.subr.bf16.mxu0 0
  %397 = vmatpush2.bf16.msra.mxu0 %v360
  %398 = vmatprep.subr.bf16.mxu0 0
  %399 = vmatpush2.bf16.msra.mxu0 %v359
  %400 = vmatprep.subr.bf16.mxu0 0
  %401 = vmatpush2.bf16.msra.mxu0 %v358
  %402 = vmatprep.subr.bf16.mxu0 0
  %403 = vmatpush2.bf16.msra.mxu0 %v357
  %404 = vmatprep.subr.bf16.mxu0 0
  %405 = vmatpush2.bf16.msra.mxu0 %v356
  %406 = vmatprep.subr.bf16.mxu0 0
  %407 = vmatpush2.bf16.msra.mxu0 %v355
  %408 = vmatprep.subr.bf16.mxu0 0
  %409 = vmatpush2.bf16.msra.mxu0 %v354
  %410 = vmatprep.mubr.bf16.mxu0 %v64
  %411 = vmatmul.mubr.bf16.gmra.mxu0 %v63
  %v412 = vpop.f32.mrf.mxu0
  %v413 = vadd.f32 0.0, %v412
  %v414 = vpop.f32.mrf.mxu0
  %v415 = vpop.f32.mrf.mxu0
  %v416 = vadd.f32 0.0, %v415
  %v417 = vpop.f32.mrf.mxu0
  %418 = vmatprep.mubr.bf16.mxu0 %v66
  %419 = vmatmul.mubr.bf16.gmra.mxu0 %v65
  %v420 = vpop.f32.mrf.mxu0
  %v421 = vadd.f32 0.0, %v420
  %v422 = vpop.f32.mrf.mxu0
  %v423 = vpop.f32.mrf.mxu0
  %v424 = vadd.f32 0.0, %v423
  %v425 = vpop.f32.mrf.mxu0
  %426 = vdwg.mxu0
  %v427 = vlaneseq
  %v428 = vshrl.u32 %v427, 7
  %v429 = vadd.s32 %v428, 8
  %v430 = vadd.s32 %v428, 16
  %v431 = vadd.s32 %v428, 24
  %vm432 = vcmp.lt.s32.totalorder %v428, 0
  %v433 = vsub.s32 0, %v428
  %v434 = vsel %vm432, %v433, %v428
  %v435 = vshrl.u32 %v434, 4
  %v436 = vand.u32 %v434, 15
  %v437 = vsub.s32 0, %v436
  %v438 = vsel %vm432, %v437, %v436
  %vm439 = vcmp.lt.s32.totalorder %v429, 0
  %v440 = vsub.s32 0, %v429
  %v441 = vsel %vm439, %v440, %v429
  %v442 = vshrl.u32 %v441, 4
  %v443 = vand.u32 %v441, 15
  %v444 = vsub.s32 0, %v443
  %v445 = vsel %vm439, %v444, %v443
  %vm446 = vcmp.lt.s32.totalorder %v430, 0
  %v447 = vsub.s32 0, %v430
  %v448 = vsel %vm446, %v447, %v430
  %v449 = vshrl.u32 %v448, 4
  %v450 = vand.u32 %v448, 15
  %v451 = vsub.s32 0, %v450
  %v452 = vsel %vm446, %v451, %v450
  %vm453 = vcmp.lt.s32.totalorder %v431, 0
  %v454 = vsub.s32 0, %v431
  %v455 = vsel %vm453, %v454, %v431
  %v456 = vshrl.u32 %v455, 4
  %v457 = vand.u32 %v455, 15
  %v458 = vsub.s32 0, %v457
  %v459 = vsel %vm453, %v458, %v457
  %vm460 = vcmp.ne.s32.totalorder %v438, 0
  %vm461 = vcmp.ne.s32.totalorder %v445, 0
  %vm462 = vcmp.ne.s32.totalorder %v452, 0
  %vm463 = vcmp.ne.s32.totalorder %v459, 0
  %vm464 = vcmp.lt.s32.totalorder %v438, 0
  %vm465 = vcmp.lt.s32.totalorder %v445, 0
  %vm466 = vcmp.lt.s32.totalorder %v452, 0
  %vm467 = vcmp.lt.s32.totalorder %v459, 0
  %vm468 = vmand %vm464, %vm460
  %vm469 = vmand %vm465, %vm461
  %vm470 = vmand %vm466, %vm462
  %vm471 = vmand %vm467, %vm463
  %v472 = vadd.s32 %v438, 16
  %v473 = vadd.s32 %v445, 16
  %v474 = vadd.s32 %v452, 16
  %v475 = vadd.s32 %v459, 16
  %v476 = vsel %vm468, %v472, %v438
  %v477 = vsel %vm469, %v473, %v445
  %v478 = vsel %vm470, %v474, %v452
  %v479 = vsel %vm471, %v475, %v459
  %vm480 = vcmp.eq.s32.totalorder %v476, 0
  %vm481 = vcmp.eq.s32.totalorder %v477, 0
  %vm482 = vcmp.eq.s32.totalorder %v478, 0
  %vm483 = vcmp.eq.s32.totalorder %v479, 0
  %vm484 = vcmp.eq.s32.totalorder %v476, 15
  %vm485 = vcmp.eq.s32.totalorder %v477, 15
  %vm486 = vcmp.eq.s32.totalorder %v478, 15
  %vm487 = vcmp.eq.s32.totalorder %v479, 15
  %v488 = vrot.slane %v202, 7
  %v489 = vrot.slane %v205, 7
  %v490 = vrot.slane %v210, 7
  %v491 = vrot.slane %v213, 7
  %vm492 = vcmp.lt.s32.totalorder %v428, 1
  %v493 = vsel %vm492, %v490, %v491
  %v494 = vsel %vm492, %v489, %v490
  %v495 = vsel %vm492, %v488, %v489
  %v496 = vsel %vm492, %v491, %v488
  %v497 = vsel %vm480, 1, 0
  %v498 = vsel %vm481, 1, 0
  %v499 = vsel %vm482, 1, 0
  %v500 = vsel %vm483, 1, 0
  %vm501 = vcmp.eq.s32.totalorder %v497, 1
  %vm502 = vcmp.eq.s32.totalorder %v498, 1
  %vm503 = vcmp.eq.s32.totalorder %v499, 1
  %vm504 = vcmp.eq.s32.totalorder %v500, 1
  %v505 = vsel %vm501, 0.0, %v496
  %v506 = vsel %vm502, 0.0, %v495
  %v507 = vsel %vm503, 0.0, %v494
  %v508 = vsel %vm504, 0.0, %v493
  %v541 = vunpack.c.l.b16 %v217
  %v542 = vunpack.c.l.b16 %v218
  %v543 = vunpack.c.l.b16 %v219
  %v544 = vunpack.c.l.b16 %v220
  %v545 = vunpack.c.l.b16 %v221
  %v546 = vunpack.c.l.b16 %v222
  %v547 = vunpack.c.l.b16 %v223
  %v548 = vunpack.c.l.b16 %v224
  %v549 = vunpack.c.l.b16 %v225
  %v550 = vunpack.c.l.b16 %v226
  %v551 = vunpack.c.l.b16 %v227
  %v552 = vunpack.c.l.b16 %v228
  %v553 = vunpack.c.l.b16 %v229
  %v554 = vunpack.c.l.b16 %v230
  %v555 = vunpack.c.l.b16 %v231
  %v556 = vunpack.c.l.b16 %v232
  %v557 = vunpack.c.l.b16 %v233
  %v558 = vunpack.c.l.b16 %v234
  %v559 = vunpack.c.l.b16 %v235
  %v560 = vunpack.c.l.b16 %v236
  %v561 = vunpack.c.l.b16 %v237
  %v562 = vunpack.c.l.b16 %v238
  %v563 = vunpack.c.l.b16 %v239
  %v564 = vunpack.c.l.b16 %v240
  %v565 = vunpack.c.l.b16 %v241
  %v566 = vunpack.c.l.b16 %v242
  %v567 = vunpack.c.l.b16 %v243
  %v568 = vunpack.c.l.b16 %v244
  %v569 = vunpack.c.l.b16 %v245
  %v570 = vunpack.c.l.b16 %v246
  %v571 = vunpack.c.l.b16 %v247
  %v572 = vunpack.c.l.b16 %v248
  %v573 = vpack.c.b16 %v542, %v541
  %v574 = vpack.c.b16 %v544, %v543
  %v575 = vpack.c.b16 %v546, %v545
  %v576 = vpack.c.b16 %v548, %v547
  %v577 = vpack.c.b16 %v550, %v549
  %v578 = vpack.c.b16 %v552, %v551
  %v579 = vpack.c.b16 %v554, %v553
  %v580 = vpack.c.b16 %v556, %v555
  %v581 = vpack.c.b16 %v558, %v557
  %v582 = vpack.c.b16 %v560, %v559
  %v583 = vpack.c.b16 %v562, %v561
  %v584 = vpack.c.b16 %v564, %v563
  %v585 = vpack.c.b16 %v566, %v565
  %v586 = vpack.c.b16 %v568, %v567
  %v587 = vpack.c.b16 %v570, %v569
  %v588 = vpack.c.b16 %v572, %v571
  %605 = vmatprep.subr.bf16.mxu0 0
  %606 = vmatpush1.bf16.msra.mxu0 %v580
  %607 = vmatprep.subr.bf16.mxu0 0
  %608 = vmatpush1.bf16.msra.mxu0 %v579
  %609 = vmatprep.subr.bf16.mxu0 0
  %610 = vmatpush1.bf16.msra.mxu0 %v578
  %611 = vmatprep.subr.bf16.mxu0 0
  %612 = vmatpush1.bf16.msra.mxu0 %v577
  %613 = vmatprep.subr.bf16.mxu0 0
  %614 = vmatpush1.bf16.msra.mxu0 %v576
  %615 = vmatprep.subr.bf16.mxu0 0
  %616 = vmatpush1.bf16.msra.mxu0 %v575
  %617 = vmatprep.subr.bf16.mxu0 0
  %618 = vmatpush1.bf16.msra.mxu0 %v574
  %619 = vmatprep.subr.bf16.mxu0 0
  %620 = vmatpush1.bf16.msra.mxu0 %v573
  %621 = vmatprep.subr.bf16.mxu0 0
  %622 = vmatpush2.bf16.msra.mxu0 %v588
  %623 = vmatprep.subr.bf16.mxu0 0
  %624 = vmatpush2.bf16.msra.mxu0 %v587
  %625 = vmatprep.subr.bf16.mxu0 0
  %626 = vmatpush2.bf16.msra.mxu0 %v586
  %627 = vmatprep.subr.bf16.mxu0 0
  %628 = vmatpush2.bf16.msra.mxu0 %v585
  %629 = vmatprep.subr.bf16.mxu0 0
  %630 = vmatpush2.bf16.msra.mxu0 %v584
  %631 = vmatprep.subr.bf16.mxu0 0
  %632 = vmatpush2.bf16.msra.mxu0 %v583
  %633 = vmatprep.subr.bf16.mxu0 0
  %634 = vmatpush2.bf16.msra.mxu0 %v582
  %635 = vmatprep.subr.bf16.mxu0 0
  %636 = vmatpush2.bf16.msra.mxu0 %v581
  %637 = vmatprep.mubr.bf16.mxu0 %v64
  %638 = vmatmul.mubr.bf16.gmra.mxu0 %v63
  %v639 = vpop.f32.mrf.mxu0
  %v640 = vadd.f32 %v505, %v639
  %v641 = vpop.f32.mrf.mxu0
  %v642 = vpop.f32.mrf.mxu0
  %v643 = vadd.f32 %v506, %v642
  %v644 = vpop.f32.mrf.mxu0
  %645 = vmatprep.mubr.bf16.mxu0 %v66
  %646 = vmatmul.mubr.bf16.gmra.mxu0 %v65
  %v647 = vpop.f32.mrf.mxu0
  %v648 = vadd.f32 %v507, %v647
  %v649 = vpop.f32.mrf.mxu0
  %v650 = vpop.f32.mrf.mxu0
  %v651 = vadd.f32 %v508, %v650
  %v652 = vpop.f32.mrf.mxu0
  %653 = vdwg.mxu0
  %v654 = vrot.slane %v413, 1
  %v655 = vrot.slane %v416, 1
  %v656 = vrot.slane %v421, 1
  %v657 = vrot.slane %v424, 1
  %vm658 = vcmp.lt.s32.totalorder %v428, 7
  %v659 = vsel %vm658, %v656, %v657
  %v660 = vsel %vm658, %v655, %v656
  %v661 = vsel %vm658, %v654, %v655
  %v662 = vsel %vm658, %v657, %v654
  %v663 = vsel %vm484, 1, 0
  %v664 = vsel %vm485, 1, 0
  %v665 = vsel %vm486, 1, 0
  %v666 = vsel %vm487, 1, 0
  %vm667 = vcmp.eq.s32.totalorder %v663, 1
  %vm668 = vcmp.eq.s32.totalorder %v664, 1
  %vm669 = vcmp.eq.s32.totalorder %v665, 1
  %vm670 = vcmp.eq.s32.totalorder %v666, 1
  %v671 = vsel %vm667, 0.0, %v661
  %v672 = vsel %vm668, 0.0, %v660
  %v673 = vsel %vm669, 0.0, %v659
  %v674 = vsel %vm670, 0.0, %v662
  %v675 = vadd.f32 %v640, %v671
  %v676 = vadd.f32 %v643, %v672
  %v677 = vadd.f32 %v648, %v673
  %v678 = vadd.f32 %v651, %v674
  %v679 = vld [vmem:[%s2] sm:$0x1]
  %v681 = vlaneseq
  %v682 = vshrl.u32 %v681, 7
  %v683 = vsub.s32 0, %v682
  %v684 = vrot.slane %v679, %v683
  %v686 = vadd.f32 %v675, %v684
  %v687 = vadd.f32 %v676, %v684
  %v688 = vadd.f32 %v677, %v684
  %v689 = vadd.f32 %v678, %v684
  %v690 = vmax.f32 %v686, 0.0
  %v691 = vmax.f32 %v687, 0.0
  %v692 = vmax.f32 %v688, 0.0
  %v693 = vmax.f32 %v689, 0.0
  %694 = vst [vmem:[%s3] sm:$0xff] %v690
  %695 = vst [vmem:[%s3 + $0x8] sm:$0xff] %v691
  %696 = vst [vmem:[%s3 + $0x10] sm:$0xff] %v692
  %697 = vst [vmem:[%s3 + $0x18] sm:$0xff] %v693
  // Predicated region
  $region14: #{_lambda_.1} parent=0 // pred_check
    _
  $region15: #{_lambda_.1} parent=0 // pred_check_branch
    %699 = sbr.rel (0) target = $region17
  $region16: #{_lambda_.1} parent=0 // pred_region
    _
  $region17: #{_lambda_.1} parent=0 // pred_fallthru
    _
  // Predicated region
  $region18: #{_lambda_.1} parent=0 // pred_check
    _
  $region19: #{_lambda_.1} parent=0 // pred_check_branch
    %701 = sbr.rel (0) target = $region21
  $region20: #{_lambda_.1} parent=0 // pred_region
    _
  $region21: #{_lambda_.1} parent=0 // pred_fallthru
    _

</llo_original>
